<compile_context>
chip_gen: v7x
topology: tpu7x:2x2x1
jax: 0.10.0
libtpu: 0.0.40
codegen_flags: <defaults>
</compile_context>

<pallas_src>
import jax
import jax.numpy as jnp
from jax import lax
from jax.experimental import pallas as pl
from jax.experimental.pallas import tpu as pltpu


def _linear_kernel(x_ref, w_ref, b_ref, o_ref):
    # x_ref: (TB, D) VMEM tile; w_ref: (1, D) VMEM (lane-dense);
    # b_ref: (1,) SMEM f32 scalar; o_ref: (1, TB) VMEM lane-dense output row.
    acc = lax.dot_general(
        w_ref[...], x_ref[...],
        dimension_numbers=(((1,), (1,)), ((), ())),   # contract over D -> (1, TB), MXU
        preferred_element_type=jnp.float32,
    )
    o_ref[...] = (acc + b_ref[0]).astype(o_ref.dtype)


def _choose_tile_rows(batch: int, d: int) -> int:
    """Rows per tile, sized by actual HBM bytes per grid step (not lane-padded
    VMEM bytes), with a VMEM cap that keeps the double-buffered set v7x-safe."""
    bytes_per_row_hbm = d * 4                       # real f32 HBM traffic per row
    target_hbm_bytes = 8 << 20                      # ~8 MiB of HBM traffic per step
    lanes = max(128, pl.cdiv(d, 128) * 128)         # VMEM pads the minor dim to 128
    vmem_buf_cap = 12 << 20                         # per x buffer (double-buffered -> ~24 MiB)

    tb = target_hbm_bytes // bytes_per_row_hbm
    tb = min(tb, vmem_buf_cap // (lanes * 4))
    if batch >= 256:
        # Keep >= 2 tiles so ("parallel",) can split the grid over both v7x TCs.
        tb = min(tb, (batch // 2 // 128) * 128)
    return max(128, (tb // 128) * 128)              # 128-aligned -> lane-dense output blocks


def linear_regression_forward(features: jax.Array, weight: jax.Array, bias: jax.Array) -> jax.Array:
    """features: (B, D) f32; weight: (1, D) f32 (PyTorch nn.Linear layout);
    bias: (1,) f32.  Returns (B, 1) f32, matching torch.nn.Linear(D, 1)(features)."""
    B, D = features.shape
    assert weight.shape == (1, D)
    assert bias.shape == (1,)

    TB = _choose_tile_rows(B, D)
    if TB >= B:
        TB = B                      # single tile == full array; no ragged handling needed
    num_tiles = pl.cdiv(B, TB)
    B_out = num_tiles * TB

    bias_smem = bias.reshape(1).astype(jnp.float32)     # f32 scalar in SMEM

    out = pl.pallas_call(
        _linear_kernel,
        out_shape=jax.ShapeDtypeStruct((1, B_out), features.dtype),
        grid_spec=pl.GridSpec(
            grid=(num_tiles,),
            in_specs=[
                pl.BlockSpec((TB, D), lambda i: (i, 0)),             # x: batch-tiled rows
                pl.BlockSpec((1, D), lambda i: (0, 0)),              # w: full, lane-dense
                pl.BlockSpec(memory_space=pltpu.MemorySpace.SMEM),   # bias: SMEM scalar
            ],
            out_specs=pl.BlockSpec((1, TB), lambda i: (0, i)),       # lane-dense output row
        ),
        compiler_params=pltpu.CompilerParams(
            dimension_semantics=("parallel",),      # v7x: shard batch grid over both TCs
            vmem_limit_bytes=48 * 1024 * 1024,
        ),
    )(features, weight, bias_smem)

    return out.reshape(B_out, 1)[:B]


if __name__ == "__main__":
    input_size = 32
    batch = 8

    key = jax.random.PRNGKey(0)
    k_x, k_w, k_b = jax.random.split(key, 3)

    # Deterministic synthetic parameters (shapes follow nn.Linear(input_size, 1)).
    features = jax.random.normal(k_x, (batch, input_size), dtype=jnp.float32)
    weight = jax.random.normal(k_w, (1, input_size), dtype=jnp.float32) * 0.1
    bias = jax.random.normal(k_b, (1,), dtype=jnp.float32) * 0.1

    out = jax.block_until_ready(linear_regression_forward(features, weight, bias))

    # Exact-f32 reference (elementwise multiply + sum, no matmul demotion).
    ref = jnp.sum(features * weight, axis=-1, keepdims=True) + bias
    assert out.shape == (batch, 1)
    assert jnp.allclose(out, ref, atol=1e-5, rtol=1e-5)

    # Also exercise the multi-tile / ragged-batch path (still tiny).
    batch2 = 300
    features2 = jax.random.normal(k_x, (batch2, input_size), dtype=jnp.float32)
    out2 = jax.block_until_ready(linear_regression_forward(features2, weight, bias))
    ref2 = jnp.sum(features2 * weight, axis=-1, keepdims=True) + bias
    assert out2.shape == (batch2, 1)
    assert jnp.allclose(out2, ref2, atol=1e-5, rtol=1e-5)

    print("KERNEL_OK")
</pallas_src>

<mosaic_0001>
module attributes {stable_mosaic.version = 11 : i64} {
  func.func @_linear_kernel(%arg0: i32, %arg1: memref<8x32xf32, #tpu.memory_space<vmem>>, %arg2: memref<1x32xf32, #tpu.memory_space<vmem>>, %arg3: memref<1xf32, #tpu.memory_space<smem>>, %arg4: memref<1x8xf32, #tpu.memory_space<vmem>>) attributes {dimension_semantics = [#tpu.dimension_semantics<parallel>], iteration_bounds = array<i64: 1>, scalar_prefetch = 0 : i64, scratch_operands = 0 : i64, tpu.core_type = #tpu.core_type<tc>, window_params = [{transform_indices = @transform_0, window_bounds = array<i64: 8, 32>}, {pipeline_mode = #tpu.pipeline_mode<synchronous>, transform_indices = @transform_1, window_bounds = array<i64: 1, 32>}, {transform_indices = @transform_2, window_bounds = array<i64: 1>}, {transform_indices = @transform_3, window_bounds = array<i64: 1, 8>}]} {
    %c0 = arith.constant 0 : index
    %c0_0 = arith.constant 0 : index
    %0 = vector.load %arg2[%c0, %c0_0] : memref<1x32xf32, #tpu.memory_space<vmem>>, vector<1x32xf32>
    %c0_1 = arith.constant 0 : index
    %c0_2 = arith.constant 0 : index
    %1 = vector.load %arg1[%c0_1, %c0_2] : memref<8x32xf32, #tpu.memory_space<vmem>>, vector<8x32xf32>
    %cst = arith.constant dense<0.000000e+00> : vector<1x8xf32>
    %2 = tpu.matmul %0, %1, %cst {dimension_numbers = #tpu.dot_dimension_numbers<[1], [1], [0], [0], [0, 0, 1, 0], [], []>} : vector<1x32xf32>, vector<8x32xf32>, vector<1x8xf32> -> vector<1x8xf32>
    %c0_3 = arith.constant 0 : index
    %3 = memref.load %arg3[%c0_3] : memref<1xf32, #tpu.memory_space<smem>>
    %4 = vector.broadcast %3 : f32 to vector<1x8xf32>
    %5 = arith.addf %2, %4 : vector<1x8xf32>
    %c0_4 = arith.constant 0 : index
    %c0_5 = arith.constant 0 : index
    %6 = vector.load %arg4[%c0_4, %c0_5] : memref<1x8xf32, #tpu.memory_space<vmem>>, vector<1x8xf32>
    tpu.vector_store %arg4[%c0_4, %c0_5], %5 {strides = array<i32>} : memref<1x8xf32, #tpu.memory_space<vmem>>, vector<1x8xf32>,
    return
  }
  func.func @transform_0(%arg0: i32) -> (i32, i32) {
    %c0_i32 = arith.constant 0 : i32
    %c0_i32_0 = arith.constant 0 : i32
    return %arg0, %c0_i32 : i32, i32
  }
  func.func @transform_1(%arg0: i32) -> (i32, i32) {
    %c0_i32 = arith.constant 0 : i32
    %c0_i32_0 = arith.constant 0 : i32
    %c0_i32_1 = arith.constant 0 : i32
    return %c0_i32, %c0_i32_0 : i32, i32
  }
  func.func @transform_2(%arg0: i32) -> i32 {
    %c0_i32 = arith.constant 0 : i32
    %c0_i32_0 = arith.constant 0 : i32
    return %c0_i32 : i32
  }
  func.func @transform_3(%arg0: i32) -> (i32, i32) {
    %c0_i32 = arith.constant 0 : i32
    %c0_i32_0 = arith.constant 0 : i32
    return %c0_i32, %arg0 : i32, i32
  }
}

</mosaic_0001>

<llo_original>
// kernel: tpu_custom_call.1
$region0: #{tpu_custom_call.1}
  #allocation0 [shape = 'u32[]', space=smem, size = 0x4, offset = 0x4, fixed_abs, tag = 'smem constant byte address 0x4 - core index']
  #allocation1 [shape = 'u32[144,128]{1,0:T(1,128)}', space=vmem, size = 0x12000, scoped, tag = 'internal scratch']
  #allocation2 [shape = 'f32[1]{0:T(128)S(6)}', space=smem, size = 0x200, scoped, tag = 'scoped memory for tpu_custom_call.1']
  %s0 = inlined_call_operand.hbm [shape: f32[8,32], index: 0, kind: input, shape index: {}]
  %s1 = inlined_call_operand.vmem [shape: f32[1,32], index: 1, kind: input, shape index: {}]
  %s2 = inlined_call_operand.<no memory space> [shape: f32[1], index: 2, kind: input, shape index: {}]
  %s3 = inlined_call_operand.hbm [shape: f32[1,8], index: 3, kind: output, shape index: {}]
  %s4 = sld [smem:[#allocation0]]
  $region26: #{tpu_custom_call.1} parent=0
    _
  %s6 = ssub.s32 1, %s4
  %s7 = scalar_select 0, %s6, %s4
  %8 = sst [smem:[#allocation2]] %s2
  $region1: #{tpu_custom_call.1} parent=0
    #allocation3 [shape = 'u8[4096]{0}', space=vmem, size = 0x1000, scoped, tag = 'input window, operand 0, single buffered']
    #allocation4 [shape = 's32[1]{0}', space=sflag, size = 0x4, scoped, tag = 'scoped memory for tpu_custom_call.1']
    #allocation5 [shape = 's32[1]{0}', space=sflag, size = 0x4, scoped, tag = 'scoped memory for tpu_custom_call.1']
    #allocation6 [shape = 'u8[512]{0}', space=vmem, size = 0x400, scoped, tag = 'output window, operand 0, single buffered']
    %9 = vsyncpa [#allocation4], 0
    %10 = vsyncpa [#allocation5], 0
    // Predicated region
    $region2: #{tpu_custom_call.1} parent=1 // pred_check
      _
    $region3: #{tpu_custom_call.1} parent=1 // pred_check_branch
      %12 = sbr.rel (0) target = $region5
    $region4: #{tpu_custom_call.1} parent=1 // pred_region
      %s14 = ssub.s32 128, 128
      %15 = vsyncadd [#allocation4], %s14
      %s17 = sshll.u32 [#allocation3], 4
      %s18 = int_to_ptr.vmem [resolvable:$true] %s17
      %20 = dma.hbm_to_vmem [thread:$0]  %s0, 128, %s18, [#allocation4]
    $region5: #{tpu_custom_call.1} parent=1 // pred_fallthru
      _
    // Predicated region
    $region6: #{tpu_custom_call.1} parent=1 // pred_check
      _
    $region7: #{tpu_custom_call.1} parent=1 // pred_check_branch
      %22 = sbr.rel (0) target = $region9
    $region8: #{tpu_custom_call.1} parent=1 // pred_region
      _
    $region9: #{tpu_custom_call.1} parent=1 // pred_fallthru
      _
    // Predicated region
    $region10: #{tpu_custom_call.1} parent=1 // pred_check
      _
    $region11: #{tpu_custom_call.1} parent=1 // pred_check_branch
      %24 = sbr.rel (0) target = $region13
    $region12: #{tpu_custom_call.1} parent=1 // pred_region
      _
    $region13: #{tpu_custom_call.1} parent=1 // pred_fallthru
      _
    // Predicated region
    $region14: #{tpu_custom_call.1} parent=1 // pred_check
      _
    $region15: #{tpu_custom_call.1} parent=1 // pred_check_branch
      %26 = sbr.rel (0) target = $region17
    $region16: #{tpu_custom_call.1} parent=1 // pred_region
      %27 = dma.done [#allocation4], 128
    $region17: #{tpu_custom_call.1} parent=1 // pred_fallthru
      _
    %v28 = vld [vmem:[%s1] sm:$0x1]
    %v29 = vld [vmem:[#allocation3] sm:$0xff]
    %s30 = sld [smem:[#allocation2]]
    %v31 = vstv %s30
    %vm32 = vcmask 261120
    %v34 = vsel %vm32, %v28, 0
    %v37 = vsel %vm32, %v29, 0
    %39 = vmatprep.subr.mxu0 0.0
    %40 = vmatpush1.xpose.msra.mxu0 %v37
    %41 = vmatprep.subr.mxu0 0.0
    %42 = vmatpush1.xpose.msra.mxu0 0.0
    %43 = vmatprep.subr.mxu0 0.0
    %44 = vmatpush1.xpose.msra.mxu0 0.0
    %45 = vmatprep.subr.mxu0 0.0
    %46 = vmatpush1.xpose.msra.mxu0 0.0
    %47 = vmatprep.subr.mxu0 0.0
    %48 = vmatpush1.xpose.msra.mxu0 0.0
    %49 = vmatprep.subr.mxu0 0.0
    %50 = vmatpush1.xpose.msra.mxu0 0.0
    %51 = vmatprep.subr.mxu0 0.0
    %52 = vmatpush1.xpose.msra.mxu0 0.0
    %53 = vmatprep.subr.mxu0 0.0
    %54 = vmatpush1.xpose.msra.mxu0 0.0
    %55 = vmatprep.subr.mxu0 0.0
    %56 = vmatpush1.xpose.msra.mxu0 0.0
    %57 = vmatprep.subr.mxu0 0.0
    %58 = vmatpush1.xpose.msra.mxu0 0.0
    %59 = vmatprep.subr.mxu0 0.0
    %60 = vmatpush1.xpose.msra.mxu0 0.0
    %61 = vmatprep.subr.mxu0 0.0
    %62 = vmatpush1.xpose.msra.mxu0 0.0
    %63 = vmatprep.subr.mxu0 0.0
    %64 = vmatpush1.xpose.msra.mxu0 0.0
    %65 = vmatprep.subr.mxu0 0.0
    %66 = vmatpush1.xpose.msra.mxu0 0.0
    %67 = vmatprep.subr.mxu0 0.0
    %68 = vmatpush1.xpose.msra.mxu0 0.0
    %69 = vmatprep.subr.mxu0 0.0
    %70 = vmatpush1.xpose.msra.mxu0 0.0
    %71 = vmatprep.subr.mxu0 0.0
    %72 = vmatpush1.xpose.msra.mxu0 0.0
    %73 = vmatprep.subr.mxu0 0.0
    %74 = vmatpush1.xpose.msra.mxu0 0.0
    %75 = vmatprep.subr.mxu0 0.0
    %76 = vmatpush1.xpose.msra.mxu0 0.0
    %77 = vmatprep.subr.mxu0 0.0
    %78 = vmatpush1.xpose.msra.mxu0 0.0
    %79 = vmatprep.subr.mxu0 0.0
    %80 = vmatpush1.xpose.msra.mxu0 0.0
    %81 = vmatprep.subr.mxu0 0.0
    %82 = vmatpush1.xpose.msra.mxu0 0.0
    %83 = vmatprep.subr.mxu0 0.0
    %84 = vmatpush1.xpose.msra.mxu0 0.0
    %85 = vmatprep.subr.mxu0 0.0
    %86 = vmatpush1.xpose.msra.mxu0 0.0
    %87 = vmatprep.subr.mxu0 0.0
    %88 = vmatpush1.xpose.msra.mxu0 0.0
    %89 = vmatprep.subr.mxu0 0.0
    %90 = vmatpush1.xpose.msra.mxu0 0.0
    %91 = vmatprep.subr.mxu0 0.0
    %92 = vmatpush1.xpose.msra.mxu0 0.0
    %93 = vmatprep.subr.mxu0 0.0
    %94 = vmatpush1.xpose.msra.mxu0 0.0
    %95 = vmatprep.subr.mxu0 0.0
    %96 = vmatpush1.xpose.msra.mxu0 0.0
    %97 = vmatprep.subr.mxu0 0.0
    %98 = vmatpush1.xpose.msra.mxu0 0.0
    %99 = vmatprep.subr.mxu0 0.0
    %100 = vmatpush1.xpose.msra.mxu0 0.0
    %101 = vmatprep.subr.mxu0 0.0
    %102 = vmatpush1.xpose.msra.mxu0 0.0
    %103 = vmatprep.mubr.f32.mxu0 0.0
    %104 = vmatmul.mubr.f32.gmra.mrb[0].mxu0 %v34
    %v105 = vpop.f32.mrb[0].mxu0
    %v106 = vadd.f32 %v31, %v105
    %v107 = vpop.f32.mrb[0].mxu0
    %108 = vdwg.mxu0
    %vm109 = vcmask 57344
    %110 = vst.msk [vmem:[#allocation6] sm:$0x1] %vm109, %v106
    // Predicated region
    $region18: #{tpu_custom_call.1} parent=1 // pred_check
      _
    $region19: #{tpu_custom_call.1} parent=1 // pred_check_branch
      %112 = sbr.rel (0) target = $region21
    $region20: #{tpu_custom_call.1} parent=1 // pred_region
      %s114 = ssub.s32 16, 16
      %115 = vsyncadd [#allocation5], %s114
      %s117 = sshll.u32 [#allocation6], 4
      %s118 = int_to_ptr.vmem [resolvable:$true] %s117
      %120 = dma.vmem_to_hbm [thread:$0]  %s118, 16, %s3, [#allocation5]
    $region21: #{tpu_custom_call.1} parent=1 // pred_fallthru
      _
    // Predicated region
    $region22: #{tpu_custom_call.1} parent=1 // pred_check
      _
    $region23: #{tpu_custom_call.1} parent=1 // pred_check_branch
      %122 = sbr.rel (0) target = $region25
    $region24: #{tpu_custom_call.1} parent=1 // pred_region
      %123 = dma.done [#allocation5], 16
    $region25: #{tpu_custom_call.1} parent=1 // pred_fallthru
      _
    %124 = vsyncpa [#allocation4], 1
    %125 = vsyncpa [#allocation5], 1

</llo_original>
